<compile_context>
chip_gen: v6e
topology: v6e:2x2x1
jax: 0.10.0
libtpu: 0.0.40
codegen_flags: <defaults>
</compile_context>

<pallas_src>
import numpy as np
import jax
import jax.numpy as jnp
from jax.experimental import pallas as pl
from jax.experimental.pallas import tpu as pltpu

EPS = 1e-6  # matches torch.nn.PairwiseDistance(p=2) default: d = ||x1 - x2 + eps||_2


def _make_loglik_kernel(E, P, S, SC, NCH, TL, use_bf16_exp):
    """Kernel over one TL-lane block of the combined (16, L) parameter tile.

    Row layout of the combined tile (constants pre-folded in the wrapper):
      0..1 : event   dz_x + EPS, dz_y + EPS
      2..3 : event   dv_x, dv_y
      4..5 : event   0.5*da_x, 0.5*da_y
      6    : event   beta[u] + beta[v]
      7    : event   time
      8..9 : pair    dz_x + EPS, dz_y + EPS
      10..11: pair   dv_x, dv_y
      12..13: pair   0.5*da_x, 0.5*da_y
      14   : pair    beta[u] + beta[v] + log(w*dx)   (-1e30 on padded lanes)
      15   : zero padding
    Output block is (8, TL) of lane-dense partials; the scalar reduce happens in XLA.
    """
    need_smask = (NCH * SC != S)

    def kernel(scal_ref, p_ref, out_ref):
        i = pl.program_id(0)
        t0 = scal_ref[0]          # interval start
        dt = scal_ref[1]          # (tn - t0) / S

        # Fresh per-block output tile; final sum over all partials is done outside.
        out_ref[...] = jnp.zeros_like(out_ref)

        # --- event term: skipped entirely for blocks with no valid event lane ----
        @pl.when(i * TL < E)
        def _():
            pe = p_ref[0:8, :]                               # (8, TL) event rows
            te = pe[7:8, :]
            ex = pe[0:1, :] + te * (pe[2:3, :] + te * pe[4:5, :])
            ey = pe[1:2, :] + te * (pe[3:4, :] + te * pe[5:6, :])
            d_ev = jnp.sqrt(ex * ex + ey * ey)               # (1, TL)
            lane = jax.lax.broadcasted_iota(jnp.int32, (1, TL), 1) + i * TL
            ev_mask = (lane < E).astype(jnp.float32)         # cheap (1, TL) mask
            out_ref[0:1, :] = ev_mask * (pe[6:7, :] - d_ev)

        # --- non-event (Riemann) term: skipped for all-padding pair blocks -------
        @pl.when(i * TL < P)
        def _():
            pp = p_ref[8:16, :]                              # (8, TL) pair rows
            b14 = pp[6:7, :]                                 # beta sum + log(w*dx)

            def chunk(c, acc):
                srow = jax.lax.broadcasted_iota(jnp.int32, (SC, TL), 0) + c * SC
                t = t0 + (srow.astype(jnp.float32) + 0.5) * dt   # midpoints
                px = pp[0:1, :] + t * (pp[2:3, :] + t * pp[4:5, :])
                py = pp[1:2, :] + t * (pp[3:4, :] + t * pp[5:6, :])
                d_p = jnp.sqrt(px * px + py * py)                # (SC, TL)
                arg = b14 - d_p
                if use_bf16_exp:
                    lam = jnp.exp(arg.astype(jnp.bfloat16)).astype(jnp.float32)
                else:
                    lam = jnp.exp(arg)
                if need_smask:
                    lam = lam * (srow < S).astype(jnp.float32)
                # Fold SC sublanes into 8 with plain vreg adds (VPU, no XLU reduce).
                part = lam[0:8, :]
                for j in range(1, SC // 8):
                    part = part + lam[j * 8:(j + 1) * 8, :]
                return acc + part

            zero = jnp.zeros((8, TL), jnp.float32)
            if NCH == 1:
                acc = chunk(0, zero)
            else:
                acc = jax.lax.fori_loop(0, NCH, chunk, zero, unroll=(NCH <= 4))
            out_ref[...] -= acc

    return kernel


def smallnet_log_likelihood(beta, z0, v0, a0, data, t0, tn, pair_u, pair_v,
                            riemann_samples, non_event_weight=1.0,
                            max_lane_tile=2048, s_chunk=128, use_bf16_exp=False):
    E = int(data.shape[0])
    P = int(pair_u.shape[0])
    S = int(riemann_samples)

    # S chunking (multiple of 8 sublanes per chunk).
    SP = ((S + 7) // 8) * 8
    SC = max(8, (min(int(s_chunk), SP) // 8) * 8)
    NCH = -(-S // SC)

    # Lane-block geometry.
    maxlanes = max(E, P, 1)
    TL = min(((int(max_lane_tile) + 127) // 128) * 128,
             ((maxlanes + 127) // 128) * 128)
    G = -(-maxlanes // TL)
    L = G * TL

    u = data[:, 0].astype(jnp.int32)
    v = data[:, 1].astype(jnp.int32)
    t_ev = data[:, 2].astype(jnp.float32)

    # per-event parameter differences (glue gathers)
    dz = (z0[u] - z0[v]).astype(jnp.float32)
    dvv = (v0[u] - v0[v]).astype(jnp.float32)
    da = (a0[u] - a0[v]).astype(jnp.float32)
    bsum = (beta[u, 0] + beta[v, 0]).astype(jnp.float32)

    # per-sampled-pair parameter differences
    dzp = (z0[pair_u] - z0[pair_v]).astype(jnp.float32)
    dvp = (v0[pair_u] - v0[pair_v]).astype(jnp.float32)
    dap = (a0[pair_u] - a0[pair_v]).astype(jnp.float32)
    bsp = (beta[pair_u, 0] + beta[pair_v, 0]).astype(jnp.float32)

    dt = (tn - t0) / S
    logwdx = jnp.log(jnp.float32(non_event_weight) * jnp.float32(dt))

    def padrow(x, fill=0.0):
        return jnp.pad(x.astype(jnp.float32), (0, L - x.shape[0]),
                       constant_values=fill)

    rows = [
        padrow(dz[:, 0]) + EPS,          # 0  (EPS also on pad lanes -> no sqrt(0))
        padrow(dz[:, 1]) + EPS,          # 1
        padrow(dvv[:, 0]),               # 2
        padrow(dvv[:, 1]),               # 3
        padrow(0.5 * da[:, 0]),          # 4
        padrow(0.5 * da[:, 1]),          # 5
        padrow(bsum),                    # 6
        padrow(t_ev),                    # 7
        padrow(dzp[:, 0]) + EPS,         # 8
        padrow(dzp[:, 1]) + EPS,         # 9
        padrow(dvp[:, 0]),               # 10
        padrow(dvp[:, 1]),               # 11
        padrow(0.5 * dap[:, 0]),         # 12
        padrow(0.5 * dap[:, 1]),         # 13
        padrow(bsp + logwdx, fill=-1e30),  # 14 (pad lanes -> exp(-1e30) = 0)
        jnp.zeros((L,), jnp.float32),    # 15
    ]
    params = jnp.stack(rows, axis=0)     # (16, L)

    scalars = jnp.array([t0, dt], dtype=jnp.float32)

    kernel = _make_loglik_kernel(E, P, S, SC, NCH, TL, use_bf16_exp)

    out = pl.pallas_call(
        kernel,
        out_shape=jax.ShapeDtypeStruct((8, L), jnp.float32),
        grid_spec=pl.GridSpec(
            grid=(G,),
            in_specs=[
                pl.BlockSpec(memory_space=pltpu.MemorySpace.SMEM),   # scalars (2,)
                pl.BlockSpec((16, TL), lambda i: (0, i)),            # combined params
            ],
            out_specs=pl.BlockSpec((8, TL), lambda i: (0, i)),       # per-block partials
        ),
        compiler_params=pltpu.CompilerParams(
            dimension_semantics=("parallel",)),
    )(scalars, params)

    # Final reduce of the lane-dense partials in XLA (one cheap sum).
    return jnp.sum(out).reshape(1, 1)


def reference_forward(beta, z0, v0, a0, data, t0, tn, pair_u, pair_v, S, w):
    """Pure-JAX reference matching the PyTorch forward semantics."""
    u = data[:, 0].astype(jnp.int32)
    v = data[:, 1].astype(jnp.int32)
    te = data[:, 2][:, None]
    zu = z0[u] + v0[u] * te + 0.5 * a0[u] * te ** 2
    zv = z0[v] + v0[v] * te + 0.5 * a0[v] * te ** 2
    d = jnp.sqrt(jnp.sum((zu - zv + EPS) ** 2, axis=1))
    ev = jnp.sum(beta[u, 0] + beta[v, 0] - d)

    x = jnp.linspace(t0, tn, S + 1)
    xm = (x[:-1] + x[1:]) / 2.0
    dxv = (tn - t0) / S
    tm = xm[None, :, None]
    zu = z0[pair_u][:, None, :] + v0[pair_u][:, None, :] * tm + 0.5 * a0[pair_u][:, None, :] * tm ** 2
    zv = z0[pair_v][:, None, :] + v0[pair_v][:, None, :] * tm + 0.5 * a0[pair_v][:, None, :] * tm ** 2
    dpq = jnp.sqrt(jnp.sum((zu - zv + EPS) ** 2, axis=-1))
    lam = jnp.exp((beta[pair_u, 0] + beta[pair_v, 0])[:, None] - dpq)
    ne = jnp.sum(lam) * dxv
    return ev - w * ne


if __name__ == "__main__":
    n_points = 16
    n_events = 8
    riemann_samples = 10
    node_pair_samples = 6
    non_intensity_weight = 1.0
    t0, tn = 0.0, 4.0

    key = jax.random.PRNGKey(0)
    kb, kz, kv, ka, ke, kt, kp = jax.random.split(key, 7)

    # Deterministic parameter init mirroring the module's __init__ (pars_mode irrelevant
    # for the forward math: z0/v0/a0 all uniform(-0.025, 0.025), beta uniform(0, 0.025)).
    beta = jax.random.uniform(kb, (n_points, 1), minval=0.0, maxval=0.025, dtype=jnp.float32)
    z0 = jax.random.uniform(kz, (n_points, 2), minval=-0.025, maxval=0.025, dtype=jnp.float32)
    v0 = jax.random.uniform(kv, (n_points, 2), minval=-0.025, maxval=0.025, dtype=jnp.float32)
    a0 = jax.random.uniform(ka, (n_points, 2), minval=-0.025, maxval=0.025, dtype=jnp.float32)

    iu_all, iv_all = jnp.triu_indices(n_points, k=1)
    n_node_pairs = n_points * (n_points - 1) // 2

    # synthetic event data: rows (u, v, event_time)
    ev_choice = jax.random.randint(ke, (n_events,), 0, n_node_pairs)
    u_ev = iu_all[ev_choice].astype(jnp.float32)
    v_ev = iv_all[ev_choice].astype(jnp.float32)
    t_events = jnp.sort(jax.random.uniform(kt, (n_events,), minval=t0, maxval=tn, dtype=jnp.float32))
    data = jnp.stack([u_ev, v_ev, t_events], axis=1)

    # node-pair sampling (torch.randperm equivalent; randomness is not bit-reproducible
    # with torch, so a deterministic JAX permutation is used)
    perm = jax.random.permutation(kp, n_node_pairs)[:node_pair_samples]
    pair_u = iu_all[perm]
    pair_v = iv_all[perm]

    ll = smallnet_log_likelihood(beta, z0, v0, a0, data, t0, tn, pair_u, pair_v,
                                 riemann_samples, non_intensity_weight)
    ll = jax.block_until_ready(ll)

    ref = reference_forward(beta, z0, v0, a0, data, t0, tn, pair_u, pair_v,
                            riemann_samples, non_intensity_weight)
    assert ll.shape == (1, 1)
    assert np.allclose(np.asarray(ll), np.asarray(ref).reshape(1, 1), rtol=2e-3, atol=1e-4), (ll, ref)
    print("KERNEL_OK")
</pallas_src>

<mosaic_0001>
module attributes {stable_mosaic.version = 11 : i64} {
  func.func @kernel(%arg0: i32, %arg1: memref<2xf32, #tpu.memory_space<smem>>, %arg2: memref<16x128xf32, #tpu.memory_space<vmem>>, %arg3: memref<8x128xf32, #tpu.memory_space<vmem>>) attributes {dimension_semantics = [#tpu.dimension_semantics<parallel>], iteration_bounds = array<i64: 1>, scalar_prefetch = 0 : i64, scratch_operands = 0 : i64, tpu.core_type = #tpu.core_type<tc>, window_params = [{transform_indices = @transform_0, window_bounds = array<i64: 2>}, {transform_indices = @transform_1, window_bounds = array<i64: 16, 128>}, {transform_indices = @transform_2, window_bounds = array<i64: 8, 128>}]} {
    %c0 = arith.constant 0 : index
    %0 = memref.load %arg1[%c0] : memref<2xf32, #tpu.memory_space<smem>>
    %c1 = arith.constant 1 : index
    %1 = memref.load %arg1[%c1] : memref<2xf32, #tpu.memory_space<smem>>
    %cst = arith.constant 0.000000e+00 : f32
    %2 = vector.broadcast %cst : f32 to vector<8x128xf32>
    %c0_0 = arith.constant 0 : index
    %c0_1 = arith.constant 0 : index
    %3 = vector.load %arg3[%c0_0, %c0_1] : memref<8x128xf32, #tpu.memory_space<vmem>>, vector<8x128xf32>
    tpu.vector_store %arg3[%c0_0, %c0_1], %2 {strides = array<i32>} : memref<8x128xf32, #tpu.memory_space<vmem>>, vector<8x128xf32>,
    %c128_i32 = arith.constant 128 : i32
    %4 = arith.muli %arg0, %c128_i32 : i32
    %c8_i32 = arith.constant 8 : i32
    %5 = arith.cmpi slt, %4, %c8_i32 : i32
    %6 = arith.extui %5 : i1 to i32
    %c0_i32 = arith.constant 0 : i32
    %7 = arith.cmpi ne, %6, %c0_i32 : i32
    scf.if %7 {
      %c0_4 = arith.constant 0 : index
      %c0_5 = arith.constant 0 : index
      %12 = vector.load %arg2[%c0_4, %c0_5] : memref<16x128xf32, #tpu.memory_space<vmem>>, vector<8x128xf32>
      %13 = vector.extract_strided_slice %12 {offsets = [7, 0], sizes = [1, 128], strides = [1, 1]} : vector<8x128xf32> to vector<1x128xf32>
      %14 = vector.extract_strided_slice %12 {offsets = [0, 0], sizes = [1, 128], strides = [1, 1]} : vector<8x128xf32> to vector<1x128xf32>
      %15 = vector.extract_strided_slice %12 {offsets = [2, 0], sizes = [1, 128], strides = [1, 1]} : vector<8x128xf32> to vector<1x128xf32>
      %16 = vector.extract_strided_slice %12 {offsets = [4, 0], sizes = [1, 128], strides = [1, 1]} : vector<8x128xf32> to vector<1x128xf32>
      %17 = arith.mulf %13, %16 : vector<1x128xf32>
      %18 = arith.addf %15, %17 : vector<1x128xf32>
      %19 = arith.mulf %13, %18 : vector<1x128xf32>
      %20 = arith.addf %14, %19 : vector<1x128xf32>
      %21 = vector.extract_strided_slice %12 {offsets = [1, 0], sizes = [1, 128], strides = [1, 1]} : vector<8x128xf32> to vector<1x128xf32>
      %22 = vector.extract_strided_slice %12 {offsets = [3, 0], sizes = [1, 128], strides = [1, 1]} : vector<8x128xf32> to vector<1x128xf32>
      %23 = vector.extract_strided_slice %12 {offsets = [5, 0], sizes = [1, 128], strides = [1, 1]} : vector<8x128xf32> to vector<1x128xf32>
      %24 = arith.mulf %13, %23 : vector<1x128xf32>
      %25 = arith.addf %22, %24 : vector<1x128xf32>
      %26 = arith.mulf %13, %25 : vector<1x128xf32>
      %27 = arith.addf %21, %26 : vector<1x128xf32>
      %28 = arith.mulf %20, %20 : vector<1x128xf32>
      %29 = arith.mulf %27, %27 : vector<1x128xf32>
      %30 = arith.addf %28, %29 : vector<1x128xf32>
      %31 = math.sqrt %30 : vector<1x128xf32>
      %32 = tpu.iota {dimensions = array<i32: 1>} : vector<1x128xi32>
      %c128_i32_6 = arith.constant 128 : i32
      %33 = arith.muli %arg0, %c128_i32_6 : i32
      %34 = vector.broadcast %33 : i32 to vector<1x128xi32>
      %35 = arith.addi %32, %34 : vector<1x128xi32>
      %c8_i32_7 = arith.constant 8 : i32
      %36 = vector.broadcast %c8_i32_7 : i32 to vector<1x128xi32>
      %37 = arith.cmpi slt, %35, %36 : vector<1x128xi32>
      %38 = arith.extui %37 : vector<1x128xi1> to vector<1x128xi32>
      %39 = arith.sitofp %38 : vector<1x128xi32> to vector<1x128xf32>
      %40 = vector.extract_strided_slice %12 {offsets = [6, 0], sizes = [1, 128], strides = [1, 1]} : vector<8x128xf32> to vector<1x128xf32>
      %41 = arith.subf %40, %31 : vector<1x128xf32>
      %42 = arith.mulf %39, %41 : vector<1x128xf32>
      %c0_8 = arith.constant 0 : index
      %c0_9 = arith.constant 0 : index
      %43 = vector.load %arg3[%c0_8, %c0_9] : memref<8x128xf32, #tpu.memory_space<vmem>>, vector<1x128xf32>
      tpu.vector_store %arg3[%c0_8, %c0_9], %42 {strides = array<i32>} : memref<8x128xf32, #tpu.memory_space<vmem>>, vector<1x128xf32>,
    } else {
    }
    %c128_i32_2 = arith.constant 128 : i32
    %8 = arith.muli %arg0, %c128_i32_2 : i32
    %c6_i32 = arith.constant 6 : i32
    %9 = arith.cmpi slt, %8, %c6_i32 : i32
    %10 = arith.extui %9 : i1 to i32
    %c0_i32_3 = arith.constant 0 : i32
    %11 = arith.cmpi ne, %10, %c0_i32_3 : i32
    scf.if %11 {
      %c8 = arith.constant 8 : index
      %c0_4 = arith.constant 0 : index
      %12 = vector.load %arg2[%c8, %c0_4] : memref<16x128xf32, #tpu.memory_space<vmem>>, vector<8x128xf32>
      %13 = vector.extract_strided_slice %12 {offsets = [6, 0], sizes = [1, 128], strides = [1, 1]} : vector<8x128xf32> to vector<1x128xf32>
      %cst_5 = arith.constant 0.000000e+00 : f32
      %14 = vector.broadcast %cst_5 : f32 to vector<8x128xf32>
      %15 = tpu.iota {dimensions = array<i32: 0>} : vector<16x128xi32>
      %c0_i32_6 = arith.constant 0 : i32
      %16 = vector.broadcast %c0_i32_6 : i32 to vector<16x128xi32>
      %17 = arith.addi %15, %16 : vector<16x128xi32>
      %18 = arith.sitofp %17 : vector<16x128xi32> to vector<16x128xf32>
      %cst_7 = arith.constant 5.000000e-01 : f32
      %19 = vector.broadcast %cst_7 : f32 to vector<16x128xf32>
      %20 = arith.addf %18, %19 : vector<16x128xf32>
      %21 = vector.broadcast %1 : f32 to vector<16x128xf32>
      %22 = arith.mulf %20, %21 : vector<16x128xf32>
      %23 = vector.broadcast %0 : f32 to vector<16x128xf32>
      %24 = arith.addf %23, %22 : vector<16x128xf32>
      %25 = vector.extract_strided_slice %12 {offsets = [0, 0], sizes = [1, 128], strides = [1, 1]} : vector<8x128xf32> to vector<1x128xf32>
      %26 = vector.extract_strided_slice %12 {offsets = [2, 0], sizes = [1, 128], strides = [1, 1]} : vector<8x128xf32> to vector<1x128xf32>
      %27 = vector.extract_strided_slice %12 {offsets = [4, 0], sizes = [1, 128], strides = [1, 1]} : vector<8x128xf32> to vector<1x128xf32>
      %28 = vector.broadcast %27 : vector<1x128xf32> to vector<16x128xf32>
      %29 = arith.mulf %24, %28 : vector<16x128xf32>
      %30 = vector.broadcast %26 : vector<1x128xf32> to vector<16x128xf32>
      %31 = arith.addf %30, %29 : vector<16x128xf32>
      %32 = arith.mulf %24, %31 : vector<16x128xf32>
      %33 = vector.broadcast %25 : vector<1x128xf32> to vector<16x128xf32>
      %34 = arith.addf %33, %32 : vector<16x128xf32>
      %35 = vector.extract_strided_slice %12 {offsets = [1, 0], sizes = [1, 128], strides = [1, 1]} : vector<8x128xf32> to vector<1x128xf32>
      %36 = vector.extract_strided_slice %12 {offsets = [3, 0], sizes = [1, 128], strides = [1, 1]} : vector<8x128xf32> to vector<1x128xf32>
      %37 = vector.extract_strided_slice %12 {offsets = [5, 0], sizes = [1, 128], strides = [1, 1]} : vector<8x128xf32> to vector<1x128xf32>
      %38 = vector.broadcast %37 : vector<1x128xf32> to vector<16x128xf32>
      %39 = arith.mulf %24, %38 : vector<16x128xf32>
      %40 = vector.broadcast %36 : vector<1x128xf32> to vector<16x128xf32>
      %41 = arith.addf %40, %39 : vector<16x128xf32>
      %42 = arith.mulf %24, %41 : vector<16x128xf32>
      %43 = vector.broadcast %35 : vector<1x128xf32> to vector<16x128xf32>
      %44 = arith.addf %43, %42 : vector<16x128xf32>
      %45 = arith.mulf %34, %34 : vector<16x128xf32>
      %46 = arith.mulf %44, %44 : vector<16x128xf32>
      %47 = arith.addf %45, %46 : vector<16x128xf32>
      %48 = math.sqrt %47 : vector<16x128xf32>
      %49 = vector.broadcast %13 : vector<1x128xf32> to vector<16x128xf32>
      %50 = arith.subf %49, %48 : vector<16x128xf32>
      %51 = math.exp %50 : vector<16x128xf32>
      %c10_i32 = arith.constant 10 : i32
      %52 = vector.broadcast %c10_i32 : i32 to vector<16x128xi32>
      %53 = arith.cmpi slt, %17, %52 : vector<16x128xi32>
      %54 = arith.extui %53 : vector<16x128xi1> to vector<16x128xi32>
      %55 = arith.sitofp %54 : vector<16x128xi32> to vector<16x128xf32>
      %56 = arith.mulf %51, %55 : vector<16x128xf32>
      %57 = vector.extract_strided_slice %56 {offsets = [0, 0], sizes = [8, 128], strides = [1, 1]} : vector<16x128xf32> to vector<8x128xf32>
      %58 = vector.extract_strided_slice %56 {offsets = [8, 0], sizes = [8, 128], strides = [1, 1]} : vector<16x128xf32> to vector<8x128xf32>
      %59 = arith.addf %57, %58 : vector<8x128xf32>
      %60 = arith.addf %14, %59 : vector<8x128xf32>
      %c0_8 = arith.constant 0 : index
      %c0_9 = arith.constant 0 : index
      %61 = vector.load %arg3[%c0_8, %c0_9] : memref<8x128xf32, #tpu.memory_space<vmem>>, vector<8x128xf32>
      %62 = arith.subf %61, %60 : vector<8x128xf32>
      %c0_10 = arith.constant 0 : index
      %c0_11 = arith.constant 0 : index
      %63 = vector.load %arg3[%c0_10, %c0_11] : memref<8x128xf32, #tpu.memory_space<vmem>>, vector<8x128xf32>
      tpu.vector_store %arg3[%c0_10, %c0_11], %62 {strides = array<i32>} : memref<8x128xf32, #tpu.memory_space<vmem>>, vector<8x128xf32>,
    } else {
    }
    return
  }
  func.func @transform_0(%arg0: i32) -> i32 {
    %c0_i32 = arith.constant 0 : i32
    %c0_i32_0 = arith.constant 0 : i32
    return %c0_i32 : i32
  }
  func.func @transform_1(%arg0: i32) -> (i32, i32) {
    %c0_i32 = arith.constant 0 : i32
    %c0_i32_0 = arith.constant 0 : i32
    return %c0_i32, %arg0 : i32, i32
  }
  func.func @transform_2(%arg0: i32) -> (i32, i32) {
    %c0_i32 = arith.constant 0 : i32
    %c0_i32_0 = arith.constant 0 : i32
    return %c0_i32, %arg0 : i32, i32
  }
}

</mosaic_0001>

<llo_original>
// kernel: tpu_custom_call.1
$region0: #{tpu_custom_call.1}
  #allocation0 [shape = 'u32[]', space=smem, size = 0x4, offset = 0x4, fixed_abs, tag = 'smem constant byte address 0x4 - core index']
  #allocation1 [shape = 'u32[144,128]{1,0:T(1,128)}', space=vmem, size = 0x12000, scoped, tag = 'internal scratch']
  %s0 = inlined_call_operand.hbm [shape: f32[2], index: 0, kind: input, shape index: {}]
  %s1 = inlined_call_operand.hbm [shape: f32[16,128], index: 1, kind: input, shape index: {}]
  %s2 = inlined_call_operand.hbm [shape: f32[8,128], index: 2, kind: output, shape index: {}]
  %s3 = sld [smem:[#allocation0]]
  $region34: #{tpu_custom_call.1} parent=0
    _
  %s5 = ssub.s32 1, %s3
  %s6 = scalar_select 0, %s5, %s3
  $region1: #{tpu_custom_call.1} parent=0
    #allocation2 [shape = 'u8[512]{0}', space=smem, size = 0x200, scoped, tag = 'input window, operand 0, single buffered']
    #allocation3 [shape = 's32[1]{0}', space=sflag, size = 0x4, scoped, tag = 'scoped memory for tpu_custom_call.1']
    #allocation4 [shape = 's32[1]{0}', space=sflag, size = 0x4, scoped, tag = 'scoped memory for tpu_custom_call.1']
    #allocation5 [shape = 's32[1]{0}', space=sflag, size = 0x4, scoped, tag = 'scoped memory for tpu_custom_call.1']
    #allocation6 [shape = 'u8[8192]{0}', space=vmem, size = 0x2000, scoped, tag = 'input window, operand 1, single buffered']
    #allocation7 [shape = 'u8[4096]{0}', space=vmem, size = 0x1000, scoped, tag = 'output window, operand 0, single buffered']
    %7 = vsyncpa [#allocation5], 0
    %8 = vsyncpa [#allocation3], 0
    %9 = vsyncpa [#allocation4], 0
    // Predicated region
    $region2: #{tpu_custom_call.1} parent=1 // pred_check
      _
    $region3: #{tpu_custom_call.1} parent=1 // pred_check_branch
      %11 = sbr.rel (0) target = $region5
    $region4: #{tpu_custom_call.1} parent=1 // pred_region
      %s13 = ssub.s32 16, 16
      %14 = vsyncadd [#allocation5], %s13
      %17 = dma.hbm_to_smem %s0, 16, [#allocation2], [#allocation5]
    $region5: #{tpu_custom_call.1} parent=1 // pred_fallthru
      _
    // Predicated region
    $region6: #{tpu_custom_call.1} parent=1 // pred_check
      _
    $region7: #{tpu_custom_call.1} parent=1 // pred_check_branch
      %19 = sbr.rel (0) target = $region9
    $region8: #{tpu_custom_call.1} parent=1 // pred_region
      %s21 = ssub.s32 256, 256
      %22 = vsyncadd [#allocation3], %s21
      %s23 = sshll.u32 [#allocation6], 4
      %s24 = int_to_ptr.vmem [resolvable:$true] %s23
      %29 = dma.hbm_to_vmem [thread:$0]  %s1, 256, %s24, [#allocation3], 128, 128, 8
    $region9: #{tpu_custom_call.1} parent=1 // pred_fallthru
      _
    // Predicated region
    $region10: #{tpu_custom_call.1} parent=1 // pred_check
      _
    $region11: #{tpu_custom_call.1} parent=1 // pred_check_branch
      %31 = sbr.rel (0) target = $region13
    $region12: #{tpu_custom_call.1} parent=1 // pred_region
      %32 = dma.done [#allocation5], 16
    $region13: #{tpu_custom_call.1} parent=1 // pred_fallthru
      _
    // Predicated region
    $region14: #{tpu_custom_call.1} parent=1 // pred_check
      _
    $region15: #{tpu_custom_call.1} parent=1 // pred_check_branch
      %34 = sbr.rel (0) target = $region17
    $region16: #{tpu_custom_call.1} parent=1 // pred_region
      %35 = dma.done [#allocation3], 256
    $region17: #{tpu_custom_call.1} parent=1 // pred_fallthru
      _
    %36 = sfence
    %s37 = sld [smem:[#allocation2]]
    %s38 = sld [smem:[#allocation2 + $0x1]]
    %39 = vst [vmem:[#allocation7] sm:$0xff] 0.0
    %s40 = smul.u32 0, 128
    %p41 = scmp.lt.s32.totalorder %s40, 8
    // Predicated region
    $region18: #{tpu_custom_call.1} parent=1 // pred_check
      %p42 = pneg %p41
    $region19: #{tpu_custom_call.1} parent=1 // pred_check_branch
      %44 = sbr.rel (%p42) target = $region21
    $region20: #{tpu_custom_call.1} parent=1 // pred_region
      %v45 = vld [vmem:[#allocation6] sm:$0xff]
      %v47 = vrot.slane %v45, 5
      %v49 = vmul.f32 %v45, %v47
      %v51 = vrot.slane %v49, 5
      %v53 = vadd.f32 %v45, %v51
      %v55 = vrot.slane %v53, 3
      %v57 = vmul.f32 %v45, %v55
      %v59 = vrot.slane %v57, 7
      %v61 = vadd.f32 %v45, %v59
      %v62 = vrot.slane %v45, 6
      %v64 = vmul.f32 %v45, %v62
      %v66 = vrot.slane %v64, 4
      %v68 = vadd.f32 %v45, %v66
      %v70 = vrot.slane %v68, 4
      %v72 = vmul.f32 %v45, %v70
      %v74 = vrot.slane %v72, 6
      %v76 = vadd.f32 %v45, %v74
      %v77 = vmul.f32 %v61, %v61
      %v78 = vmul.f32 %v76, %v76
      %v80 = vrot.slane %v78, 1
      %v82 = vadd.f32 %v77, %v80
      %v83 = vrsqrt.pop %v82
      %v84 = vmul.f32 %v82, %v83
      %vm85 = vcmp.eq.f32.partialorder %v82, inf
      %v86 = vsel %vm85, %v82, %v84
      %vm87 = vcmp.eq.f32.partialorder %v82, 0.0
      %v88 = vand.u32 %v82, 2147483648
      %v89 = vsel %vm87, %v88, %v86
      %v90 = vlaneseq
      %v91 = vand.u32 %v90, 127
      %v92 = vstv %s40
      %v93 = vadd.s32 %v91, %v92
      %vm94 = vcmp.lt.s32.totalorder %v93, 8
      %v95 = vsel %vm94, 1, 0
      %v96 = vcvt.s32.f32 %v95
      %v98 = vrot.slane %v89, 2
      %v100 = vsub.f32 %v45, %v98
      %v101 = vmul.f32 %v96, %v100
      %102 = vst [vmem:[#allocation7 - $0x6] sm:$0x40] %v101
    $region21: #{tpu_custom_call.1} parent=1 // pred_fallthru
      _
    %p103 = scmp.lt.s32.totalorder %s40, 6
    // Predicated region
    $region22: #{tpu_custom_call.1} parent=1 // pred_check
      %p104 = pneg %p103
    $region23: #{tpu_custom_call.1} parent=1 // pred_check_branch
      %106 = sbr.rel (%p104) target = $region25
    $region24: #{tpu_custom_call.1} parent=1 // pred_region
      %v107 = vld [vmem:[#allocation6 + $0x8] sm:$0xff]
      %v108 = vlaneseq
      %v109 = vshrl.u32 %v108, 7
      %v110 = vadd.s32 %v109, 8
      %v111 = vcvt.s32.f32 %v109
      %v112 = vcvt.s32.f32 %v110
      %v113 = vadd.f32 %v111, 0.5
      %v114 = vadd.f32 %v112, 0.5
      %v115 = vstv %s38
      %v116 = vmul.f32 %v113, %v115
      %v117 = vmul.f32 %v114, %v115
      %v118 = vstv %s37
      %v119 = vadd.f32 %v118, %v116
      %v120 = vadd.f32 %v118, %v117
      %v121 = vlaneseq
      %v122 = vshrl.u32 %v121, 7
      %v123 = vsub.s32 4, %v122
      %v124 = vrot.slane %v107, %v123
      %v125 = vmul.f32 %v119, %v124
      %v126 = vmul.f32 %v120, %v124
      %v127 = vlaneseq
      %v128 = vshrl.u32 %v127, 7
      %v129 = vsub.s32 2, %v128
      %v130 = vrot.slane %v107, %v129
      %v131 = vadd.f32 %v130, %v125
      %v132 = vadd.f32 %v130, %v126
      %v133 = vmul.f32 %v119, %v131
      %v134 = vmul.f32 %v120, %v132
      %v135 = vlaneseq
      %v136 = vshrl.u32 %v135, 7
      %v137 = vsub.s32 0, %v136
      %v138 = vrot.slane %v107, %v137
      %v139 = vadd.f32 %v138, %v133
      %v140 = vadd.f32 %v138, %v134
      %v141 = vlaneseq
      %v142 = vshrl.u32 %v141, 7
      %v143 = vsub.s32 5, %v142
      %v144 = vrot.slane %v107, %v143
      %v145 = vmul.f32 %v119, %v144
      %v146 = vmul.f32 %v120, %v144
      %v147 = vlaneseq
      %v148 = vshrl.u32 %v147, 7
      %v149 = vsub.s32 3, %v148
      %v150 = vrot.slane %v107, %v149
      %v151 = vadd.f32 %v150, %v145
      %v152 = vadd.f32 %v150, %v146
      %v153 = vmul.f32 %v119, %v151
      %v154 = vmul.f32 %v120, %v152
      %v155 = vlaneseq
      %v156 = vshrl.u32 %v155, 7
      %v157 = vsub.s32 1, %v156
      %v158 = vrot.slane %v107, %v157
      %v159 = vadd.f32 %v158, %v153
      %v160 = vadd.f32 %v158, %v154
      %v161 = vmul.f32 %v139, %v139
      %v162 = vmul.f32 %v140, %v140
      %v163 = vmul.f32 %v159, %v159
      %v164 = vmul.f32 %v160, %v160
      %v165 = vadd.f32 %v161, %v163
      %v166 = vadd.f32 %v162, %v164
      %v167 = vrsqrt.pop %v165
      %v168 = vmul.f32 %v165, %v167
      %vm169 = vcmp.eq.f32.partialorder %v165, inf
      %v170 = vsel %vm169, %v165, %v168
      %vm171 = vcmp.eq.f32.partialorder %v165, 0.0
      %v172 = vand.u32 %v165, 2147483648
      %v173 = vsel %vm171, %v172, %v170
      %v174 = vrsqrt.pop %v166
      %v175 = vmul.f32 %v166, %v174
      %vm176 = vcmp.eq.f32.partialorder %v166, inf
      %v177 = vsel %vm176, %v166, %v175
      %vm178 = vcmp.eq.f32.partialorder %v166, 0.0
      %v179 = vand.u32 %v166, 2147483648
      %v180 = vsel %vm178, %v179, %v177
      %v181 = vlaneseq
      %v182 = vshrl.u32 %v181, 7
      %v183 = vsub.s32 6, %v182
      %v184 = vrot.slane %v107, %v183
      %v185 = vsub.f32 %v184, %v173
      %v186 = vsub.f32 %v184, %v180
      %v187 = vmul.f32 %v185, 1.442695
      %v188 = vpow.pop %v187
      %v189 = vmul.f32 %v186, 1.442695
      %v190 = vpow.pop %v189
      %vm191 = vcmp.lt.s32.totalorder %v109, 10
      %vm192 = vcmp.lt.s32.totalorder %v110, 10
      %v193 = vsel %vm191, 1, 0
      %v194 = vsel %vm192, 1, 0
      %v195 = vcvt.s32.f32 %v193
      %v196 = vcvt.s32.f32 %v194
      %v197 = vmul.f32 %v188, %v195
      %v198 = vmul.f32 %v190, %v196
      %v199 = vadd.f32 %v197, %v198
      %v200 = vadd.f32 %v199, 0.0
      %v201 = vld [vmem:[#allocation7] sm:$0xff]
      %v202 = vsub.f32 %v201, %v200
      %203 = vst [vmem:[#allocation7] sm:$0xff] %v202
    $region25: #{tpu_custom_call.1} parent=1 // pred_fallthru
      _
    // Predicated region
    $region26: #{tpu_custom_call.1} parent=1 // pred_check
      _
    $region27: #{tpu_custom_call.1} parent=1 // pred_check_branch
      %205 = sbr.rel (0) target = $region29
    $region28: #{tpu_custom_call.1} parent=1 // pred_region
      %s207 = ssub.s32 128, 128
      %208 = vsyncadd [#allocation4], %s207
      %s210 = sshll.u32 [#allocation7], 4
      %s211 = int_to_ptr.vmem [resolvable:$true] %s210
      %213 = dma.vmem_to_hbm [thread:$0]  %s211, 128, %s2, [#allocation4]
    $region29: #{tpu_custom_call.1} parent=1 // pred_fallthru
      _
    // Predicated region
    $region30: #{tpu_custom_call.1} parent=1 // pred_check
      _
    $region31: #{tpu_custom_call.1} parent=1 // pred_check_branch
      %215 = sbr.rel (0) target = $region33
    $region32: #{tpu_custom_call.1} parent=1 // pred_region
      %216 = dma.done [#allocation4], 128
    $region33: #{tpu_custom_call.1} parent=1 // pred_fallthru
      _
    %217 = vsyncpa [#allocation3], 1
    %218 = vsyncpa [#allocation4], 1
    %219 = vsyncpa [#allocation5], 1

</llo_original>
